<compile_context>
chip_gen: v6e
topology: v6e:2x2x1
jax: 0.10.0
libtpu: 0.0.40
codegen_flags: <defaults>
</compile_context>

<pallas_src>
import functools

import jax
import jax.numpy as jnp
from jax import lax
from jax.experimental import pallas as pl
from jax.experimental.pallas import tpu as pltpu


# ------------------------------- Pallas kernel -------------------------------

def _bottleneck_kernel(x_ref, w1_ref, c_ref, w3_ref, b_ref, o_ref, *, H):
    """Whole bottleneck block, fully VMEM/vreg resident.

    x_ref : (R, W*Cin)       input rows, R = N*H, column index = w*Cin + ci
    w1_ref: (W*Cin, W*Cw)    block-diag 1x1 conv1 (bn1 scale folded in)
    c_ref : (W*Cw, 3*W*Cw)   per-dy dx-shift x grouped 3x3 weights (+ bn2 scale)
    w3_ref: (W*Cw, W*Cout)   block-diag 1x1 conv3 (bn3 scale folded in)
    b_ref : (1, 3*slot)      bn biases, one 128-lane-aligned slot per bias
    o_ref : (R, W*Cout)      (aliased with x_ref's HBM buffer)
    """
    x = x_ref[...]
    R = x.shape[0]
    wc = w1_ref.shape[1]           # W * width
    wco = w3_ref.shape[1]          # W * Cout
    slot = b_ref.shape[1] // 3     # 128-lane aligned bias slot

    b1 = b_ref[:, 0:wc]
    b2 = b_ref[:, slot:slot + wc]
    b3 = b_ref[:, 2 * slot:2 * slot + wco]

    # conv1 (1x1) + bn1 + relu
    y1 = jnp.dot(x, w1_ref[...], preferred_element_type=jnp.float32)
    y1 = jnp.maximum(y1 + b1, 0.0)                               # (R, W*Cw)

    # conv2 (3x3 grouped, pad=1, stride=1) + bn2 + relu.
    # The dx/channel contraction for all three dy taps is one wide MXU matmul
    # (lane dim 3*W*Cw = 192; fine on v6e/v7x 256-wide MXU — on v5e a split
    # into three (W*Cw,W*Cw) matmuls would avoid the 128+64 MXU passes).
    t = jnp.dot(y1, c_ref[...], preferred_element_type=jnp.float32)  # (R, 3*W*Cw)
    t0 = t[:, 0:wc]            # dy = 0  (needs row h-1)
    t1 = t[:, wc:2 * wc]       # dy = 1  (identity — no matmul, no roll)
    t2 = t[:, 2 * wc:3 * wc]   # dy = 2  (needs row h+1)

    # +/-1 H-shift on the XLU (roll) + VPU mask; masking rows h==0 / h==H-1
    # also kills the cross-image wraparound rows, reproducing batch isolation.
    h_idx = lax.broadcasted_iota(jnp.int32, (R, wc), 0) % H
    up = jnp.where(h_idx != 0, pltpu.roll(t0, shift=1, axis=0), 0.0)
    dn = jnp.where(h_idx != H - 1, pltpu.roll(t2, shift=R - 1, axis=0), 0.0)
    y2 = jnp.maximum(up + t1 + dn + b2, 0.0)                     # (R, W*Cw)

    # conv3 (1x1) + bn3 + residual + relu  (stride=1, no downsample: Cin==Cout)
    z = jnp.dot(y2, w3_ref[...], preferred_element_type=jnp.float32)
    o_ref[...] = jnp.maximum(z + b3 + x, 0.0).astype(o_ref.dtype)


# -------------------------- parameter preparation ----------------------------

def prepare_params(w1, w2g, w3, s1, b1, s2, b2, s3, b3, *, Wsp, groups):
    """Fold BN + grouped-conv structure into the constant matmul operands."""
    Cin, width = w1.shape
    Cout = w3.shape[1]
    ipg = width // groups

    # Grouped 3x3 -> dense block-diagonal weights (exact), bn2 scale folded in.
    w2_dense = jnp.zeros((3, 3, width, width), jnp.float32)
    for g in range(groups):
        w2_dense = w2_dense.at[:, :, g * ipg:(g + 1) * ipg,
                               g * ipg:(g + 1) * ipg].set(
            w2g[:, :, :, g * ipg:(g + 1) * ipg])
    w2_dense = w2_dense * s2[None, None, None, :]

    eye_w = jnp.eye(Wsp, dtype=jnp.float32)
    # Block-diagonal 1x1 convs (bn scales folded into the weights).
    w1_blk = jnp.kron(eye_w, w1 * s1[None, :])            # (W*Cin, W*Cw)
    w3_blk = jnp.kron(eye_w, w3 * s3[None, :])            # (W*Cw, W*Cout)

    # C_dy[w'*Cw+ci, w*Cw+co] = w2_dense[dy, w'-w+1, ci, co] if |w'-w|<=1 else 0.
    c_list = []
    for dy in range(3):
        c = jnp.zeros((Wsp * width, Wsp * width), jnp.float32)
        for dx in range(3):
            s_dx = jnp.eye(Wsp, k=1 - dx, dtype=jnp.float32)  # [w', w]: w'=w+dx-1
            c = c + jnp.kron(s_dx, w2_dense[dy, dx])
        c_list.append(c)
    c_cat = jnp.concatenate(c_list, axis=1)               # (W*Cw, 3*W*Cw)

    # Consolidated, lane-aligned bias slab: one 128-multiple slot per bias.
    wc, wco = Wsp * width, Wsp * Cout
    slot = ((max(wc, wco) + 127) // 128) * 128

    def pad_slot(v):
        return jnp.pad(v, (0, slot - v.shape[0]))

    b_all = jnp.concatenate([pad_slot(jnp.tile(b1, Wsp)),
                             pad_slot(jnp.tile(b2, Wsp)),
                             pad_slot(jnp.tile(b3, Wsp))]).reshape(1, -1)

    return w1_blk, c_cat, w3_blk, b_all


# --------------------------------- forward -----------------------------------

def make_bottleneck_forward(H):
    """Builds the jitted forward on the lane-dense row slab (N*H, W*C)."""
    kernel = functools.partial(_bottleneck_kernel, H=H)

    def fwd(x_rows, w1_blk, c_cat, w3_blk, b_all):
        # TODO(synk): stride>1 / downsample projection branch not implemented
        # (module defaults stride=1, downsample=None => Cin == Cout, identity
        # residual, output shape == input shape).
        vmem = lambda: pl.BlockSpec(memory_space=pltpu.MemorySpace.VMEM)
        return pl.pallas_call(
            kernel,
            out_shape=jax.ShapeDtypeStruct(x_rows.shape, x_rows.dtype),
            in_specs=[vmem() for _ in range(5)],
            out_specs=vmem(),
            input_output_aliases={0: 0},   # reuse x's HBM buffer for the output
        )(x_rows, w1_blk, c_cat, w3_blk, b_all)

    return jax.jit(fwd, donate_argnums=(0,))


# ------------------------------ reference (JAX) -------------------------------

def reference_forward(x_nchw, w1, w2g, w3, s1, b1, s2, b2, s3, b3, groups):
    hp = lax.Precision.HIGHEST
    x = jnp.transpose(x_nchw, (0, 2, 3, 1)).astype(jnp.float32)
    y = jnp.einsum('nhwc,cd->nhwd', x, w1, precision=hp)
    y = jnp.maximum(y * s1 + b1, 0.0)
    y = lax.conv_general_dilated(y, w2g, (1, 1), ((1, 1), (1, 1)),
                                 dimension_numbers=('NHWC', 'HWIO', 'NHWC'),
                                 feature_group_count=groups, precision=hp)
    y = jnp.maximum(y * s2 + b2, 0.0)
    z = jnp.einsum('nhwc,cd->nhwd', y, w3, precision=hp) * s3 + b3
    out = jnp.maximum(z + x, 0.0)
    return jnp.transpose(out, (0, 3, 1, 2))


def fuse_bn(gamma, beta, mean, var, eps=1e-5):
    s = gamma / jnp.sqrt(var + eps)
    return s, beta - mean * s


# ----------------------------------- main -------------------------------------

if __name__ == "__main__":
    # Bottleneck(inplanes=16, planes=4, stride=1, downsample=None,
    #            groups=2, base_width=64)  -> width=8, out channels = 16
    N, H, Wsp = 2, 8, 8
    planes, groups, base_width = 4, 2, 64
    width = int(planes * (base_width / 64.0)) * groups          # 8
    inplanes = planes * 4                                        # 16
    Cin, Cout = inplanes, planes * 4
    ipg = width // groups

    key = jax.random.PRNGKey(0)
    ks = iter(jax.random.split(key, 12))

    x = jax.random.normal(next(ks), (N, Cin, H, Wsp), jnp.float32)

    w1 = jax.random.normal(next(ks), (Cin, width), jnp.float32) / jnp.sqrt(Cin)
    w2g = jax.random.normal(next(ks), (3, 3, ipg, width), jnp.float32) / jnp.sqrt(9 * ipg)
    w3 = jax.random.normal(next(ks), (width, Cout), jnp.float32) / jnp.sqrt(width)

    def bn_params(kk, c):
        k1, k2, k3, k4 = jax.random.split(kk, 4)
        gamma = 1.0 + 0.2 * jax.random.normal(k1, (c,), jnp.float32)
        beta = 0.1 * jax.random.normal(k2, (c,), jnp.float32)
        mean = 0.1 * jax.random.normal(k3, (c,), jnp.float32)
        var = 1.0 + 0.2 * jax.random.uniform(k4, (c,), jnp.float32)
        return gamma, beta, mean, var

    s1, b1 = fuse_bn(*bn_params(next(ks), width))
    s2, b2 = fuse_bn(*bn_params(next(ks), width))
    s3, b3 = fuse_bn(*bn_params(next(ks), Cout))

    params = prepare_params(w1, w2g, w3, s1, b1, s2, b2, s3, b3,
                            Wsp=Wsp, groups=groups)

    # One-time relayout NCHW -> lane-dense row slab (N*H, W*Cin); the kernel
    # path itself contains no transposes (a producing layer would hand over
    # this layout directly).
    x_rows = jnp.transpose(x, (0, 2, 3, 1)).reshape(N * H, Wsp * Cin)

    fwd = make_bottleneck_forward(H)
    out_rows = jax.block_until_ready(fwd(x_rows, *params))

    out = jnp.transpose(out_rows.reshape(N, H, Wsp, Cout), (0, 3, 1, 2))
    ref = reference_forward(x, w1, w2g, w3, s1, b1, s2, b2, s3, b3, groups)
    assert out.shape == (N, Cout, H, Wsp), out.shape
    max_err = float(jnp.max(jnp.abs(out - ref)))
    assert max_err < 2e-3, f"max abs err {max_err}"
    print("KERNEL_OK")
</pallas_src>

<mosaic_0001>
module attributes {stable_mosaic.version = 11 : i64} {
  func.func @_bottleneck_kernel(%arg0: memref<16x128xf32, #tpu.memory_space<vmem>>, %arg1: memref<128x64xf32, #tpu.memory_space<vmem>>, %arg2: memref<64x192xf32, #tpu.memory_space<vmem>>, %arg3: memref<64x128xf32, #tpu.memory_space<vmem>>, %arg4: memref<1x384xf32, #tpu.memory_space<vmem>>, %arg5: memref<16x128xf32, #tpu.memory_space<vmem>>) attributes {dimension_semantics = [], scalar_prefetch = 0 : i64, scratch_operands = 0 : i64, tpu.core_type = #tpu.core_type<tc>} {
    %c0 = arith.constant 0 : index
    %c0_0 = arith.constant 0 : index
    %0 = vector.load %arg0[%c0, %c0_0] : memref<16x128xf32, #tpu.memory_space<vmem>>, vector<16x128xf32>
    %c0_1 = arith.constant 0 : index
    %c0_2 = arith.constant 0 : index
    %1 = vector.load %arg4[%c0_1, %c0_2] : memref<1x384xf32, #tpu.memory_space<vmem>>, vector<1x64xf32>
    %c0_3 = arith.constant 0 : index
    %c128 = arith.constant 128 : index
    %2 = vector.load %arg4[%c0_3, %c128] : memref<1x384xf32, #tpu.memory_space<vmem>>, vector<1x64xf32>
    %c0_4 = arith.constant 0 : index
    %c256 = arith.constant 256 : index
    %3 = vector.load %arg4[%c0_4, %c256] : memref<1x384xf32, #tpu.memory_space<vmem>>, vector<1x128xf32>
    %c0_5 = arith.constant 0 : index
    %c0_6 = arith.constant 0 : index
    %4 = vector.load %arg1[%c0_5, %c0_6] : memref<128x64xf32, #tpu.memory_space<vmem>>, vector<128x64xf32>
    %cst = arith.constant dense<0.000000e+00> : vector<16x64xf32>
    %5 = tpu.matmul %0, %4, %cst {dimension_numbers = #tpu.dot_dimension_numbers<[1], [0], [0], [1], [0, 0, 1, 1], [], []>} : vector<16x128xf32>, vector<128x64xf32>, vector<16x64xf32> -> vector<16x64xf32>
    %6 = vector.broadcast %1 : vector<1x64xf32> to vector<16x64xf32>
    %7 = arith.addf %5, %6 : vector<16x64xf32>
    %cst_7 = arith.constant 0.000000e+00 : f32
    %8 = vector.broadcast %cst_7 : f32 to vector<16x64xf32>
    %9 = arith.maximumf %7, %8 : vector<16x64xf32>
    %c0_8 = arith.constant 0 : index
    %c0_9 = arith.constant 0 : index
    %10 = vector.load %arg2[%c0_8, %c0_9] : memref<64x192xf32, #tpu.memory_space<vmem>>, vector<64x192xf32>
    %cst_10 = arith.constant dense<0.000000e+00> : vector<16x192xf32>
    %11 = tpu.matmul %9, %10, %cst_10 {dimension_numbers = #tpu.dot_dimension_numbers<[1], [0], [0], [1], [0, 0, 1, 1], [], []>} : vector<16x64xf32>, vector<64x192xf32>, vector<16x192xf32> -> vector<16x192xf32>
    %12 = vector.extract_strided_slice %11 {offsets = [0, 0], sizes = [16, 64], strides = [1, 1]} : vector<16x192xf32> to vector<16x64xf32>
    %13 = vector.extract_strided_slice %11 {offsets = [0, 64], sizes = [16, 64], strides = [1, 1]} : vector<16x192xf32> to vector<16x64xf32>
    %14 = vector.extract_strided_slice %11 {offsets = [0, 128], sizes = [16, 64], strides = [1, 1]} : vector<16x192xf32> to vector<16x64xf32>
    %15 = tpu.iota {dimensions = array<i32: 0>} : vector<16x64xi32>
    %c8_i32 = arith.constant 8 : i32
    %c0_i32 = arith.constant 0 : i32
    %16 = arith.cmpi eq, %c8_i32, %c0_i32 : i32
    %c1_i32 = arith.constant 1 : i32
    %17 = arith.select %16, %c1_i32, %c8_i32 : i32
    %18 = vector.broadcast %17 : i32 to vector<16x64xi32>
    %19 = arith.remsi %15, %18 : vector<16x64xi32>
    %c0_i32_11 = arith.constant 0 : i32
    %20 = vector.broadcast %c0_i32_11 : i32 to vector<16x64xi32>
    %21 = arith.cmpi ne, %19, %20 : vector<16x64xi32>
    %c0_i32_12 = arith.constant 0 : i32
    %22 = vector.broadcast %c0_i32_12 : i32 to vector<16x64xi32>
    %23 = arith.cmpi slt, %19, %22 : vector<16x64xi32>
    %c0_i32_13 = arith.constant 0 : i32
    %24 = arith.cmpi slt, %17, %c0_i32_13 : i32
    %25 = vector.broadcast %24 : i1 to vector<16x64xi1>
    %26 = vector.broadcast %25 : vector<16x64xi1> to vector<16x64xi1>
    %27 = arith.xori %23, %26 : vector<16x64xi1>
    %28 = arith.andi %27, %21 : vector<16x64xi1>
    %29 = vector.broadcast %17 : i32 to vector<16x64xi32>
    %30 = arith.addi %19, %29 : vector<16x64xi32>
    %31 = arith.select %28, %30, %19 : vector<16x64xi1>, vector<16x64xi32>
    %c0_i32_14 = arith.constant 0 : i32
    %32 = vector.broadcast %c0_i32_14 : i32 to vector<16x64xi32>
    %33 = arith.cmpi ne, %31, %32 : vector<16x64xi32>
    %c1_i32_15 = arith.constant 1 : i32
    %34 = tpu.dynamic_rotate %12 by %c1_i32_15 dim 0 : vector<16x64xf32>, i32 -> vector<16x64xf32>
    %cst_16 = arith.constant 0.000000e+00 : f32
    %35 = vector.broadcast %cst_16 : f32 to vector<16x64xf32>
    %36 = arith.select %33, %34, %35 : vector<16x64xi1>, vector<16x64xf32>
    %c7_i32 = arith.constant 7 : i32
    %37 = vector.broadcast %c7_i32 : i32 to vector<16x64xi32>
    %38 = arith.cmpi ne, %31, %37 : vector<16x64xi32>
    %c15_i32 = arith.constant 15 : i32
    %39 = tpu.dynamic_rotate %14 by %c15_i32 dim 0 : vector<16x64xf32>, i32 -> vector<16x64xf32>
    %cst_17 = arith.constant 0.000000e+00 : f32
    %40 = vector.broadcast %cst_17 : f32 to vector<16x64xf32>
    %41 = arith.select %38, %39, %40 : vector<16x64xi1>, vector<16x64xf32>
    %42 = arith.addf %36, %13 : vector<16x64xf32>
    %43 = arith.addf %42, %41 : vector<16x64xf32>
    %44 = vector.broadcast %2 : vector<1x64xf32> to vector<16x64xf32>
    %45 = arith.addf %43, %44 : vector<16x64xf32>
    %cst_18 = arith.constant 0.000000e+00 : f32
    %46 = vector.broadcast %cst_18 : f32 to vector<16x64xf32>
    %47 = arith.maximumf %45, %46 : vector<16x64xf32>
    %c0_19 = arith.constant 0 : index
    %c0_20 = arith.constant 0 : index
    %48 = vector.load %arg3[%c0_19, %c0_20] : memref<64x128xf32, #tpu.memory_space<vmem>>, vector<64x128xf32>
    %cst_21 = arith.constant dense<0.000000e+00> : vector<16x128xf32>
    %49 = tpu.matmul %47, %48, %cst_21 {dimension_numbers = #tpu.dot_dimension_numbers<[1], [0], [0], [1], [0, 0, 1, 1], [], []>} : vector<16x64xf32>, vector<64x128xf32>, vector<16x128xf32> -> vector<16x128xf32>
    %50 = vector.broadcast %3 : vector<1x128xf32> to vector<16x128xf32>
    %51 = arith.addf %49, %50 : vector<16x128xf32>
    %52 = arith.addf %51, %0 : vector<16x128xf32>
    %cst_22 = arith.constant 0.000000e+00 : f32
    %53 = vector.broadcast %cst_22 : f32 to vector<16x128xf32>
    %54 = arith.maximumf %52, %53 : vector<16x128xf32>
    %c0_23 = arith.constant 0 : index
    %c0_24 = arith.constant 0 : index
    %55 = vector.load %arg5[%c0_23, %c0_24] : memref<16x128xf32, #tpu.memory_space<vmem>>, vector<16x128xf32>
    tpu.vector_store %arg5[%c0_23, %c0_24], %54 {strides = array<i32>} : memref<16x128xf32, #tpu.memory_space<vmem>>, vector<16x128xf32>,
    return
  }
}

</mosaic_0001>

<llo_original>
// kernel: fwd.1
$region0: #{fwd.1}
  #allocation0 [shape = 'u32[]', space=smem, size = 0x4, offset = 0x4, fixed_abs, tag = 'smem constant byte address 0x4 - core index']
  #allocation1 [shape = 'u32[144,128]{1,0:T(1,128)}', space=vmem, size = 0x12000, scoped, tag = 'internal scratch']
  %s0 = inlined_call_operand.hbm [shape: f32[16,128], index: 0, kind: input, shape index: {}, may-alias: {0,5}]
  %s1 = inlined_call_operand.vmem [shape: f32[128,64], index: 1, kind: input, shape index: {}]
  %s2 = inlined_call_operand.vmem [shape: f32[64,192], index: 2, kind: input, shape index: {}]
  %s3 = inlined_call_operand.vmem [shape: f32[64,128], index: 3, kind: input, shape index: {}]
  %s4 = inlined_call_operand.vmem [shape: f32[1,384], index: 4, kind: input, shape index: {}]
  %s5 = inlined_call_operand.hbm [shape: f32[16,128], index: 5, kind: output, shape index: {}, may-alias: {0,5}]
  %s6 = sld [smem:[#allocation0]]
  $region34: #{fwd.1} parent=0
    _
  %s8 = ssub.s32 1, %s6
  %s9 = scalar_select 0, %s8, %s6
  $region1: #{fwd.1} parent=0
    #allocation2 [shape = 'u8[8192]{0}', space=vmem, size = 0x2000, scoped, tag = 'input window, operand 0, single buffered']
    #allocation3 [shape = 's32[1]{0}', space=sflag, size = 0x4, scoped, tag = 'scoped memory for fwd.1']
    #allocation4 [shape = 's32[1]{0}', space=sflag, size = 0x4, scoped, tag = 'scoped memory for fwd.1']
    #allocation5 [shape = 'u8[8192]{0}', space=vmem, size = 0x2000, scoped, tag = 'output window, operand 0, single buffered']
    %10 = vsyncpa [#allocation3], 0
    %11 = vsyncpa [#allocation4], 0
    // Predicated region
    $region2: #{fwd.1} parent=1 // pred_check
      _
    $region3: #{fwd.1} parent=1 // pred_check_branch
      %13 = sbr.rel (0) target = $region5
    $region4: #{fwd.1} parent=1 // pred_region
      %s15 = ssub.s32 256, 256
      %16 = vsyncadd [#allocation3], %s15
      %s17 = sshll.u32 [#allocation2], 4
      %s18 = int_to_ptr.vmem [resolvable:$true] %s17
      %23 = dma.hbm_to_vmem [thread:$0]  %s0, 256, %s18, [#allocation3], 128, 128, 8
    $region5: #{fwd.1} parent=1 // pred_fallthru
      _
    // Predicated region
    $region6: #{fwd.1} parent=1 // pred_check
      _
    $region7: #{fwd.1} parent=1 // pred_check_branch
      %25 = sbr.rel (0) target = $region9
    $region8: #{fwd.1} parent=1 // pred_region
      _
    $region9: #{fwd.1} parent=1 // pred_fallthru
      _
    // Predicated region
    $region10: #{fwd.1} parent=1 // pred_check
      _
    $region11: #{fwd.1} parent=1 // pred_check_branch
      %27 = sbr.rel (0) target = $region13
    $region12: #{fwd.1} parent=1 // pred_region
      _
    $region13: #{fwd.1} parent=1 // pred_fallthru
      _
    // Predicated region
    $region14: #{fwd.1} parent=1 // pred_check
      _
    $region15: #{fwd.1} parent=1 // pred_check_branch
      %29 = sbr.rel (0) target = $region17
    $region16: #{fwd.1} parent=1 // pred_region
      _
    $region17: #{fwd.1} parent=1 // pred_fallthru
      _
    // Predicated region
    $region18: #{fwd.1} parent=1 // pred_check
      _
    $region19: #{fwd.1} parent=1 // pred_check_branch
      %31 = sbr.rel (0) target = $region21
    $region20: #{fwd.1} parent=1 // pred_region
      _
    $region21: #{fwd.1} parent=1 // pred_fallthru
      _
    // Predicated region
    $region22: #{fwd.1} parent=1 // pred_check
      _
    $region23: #{fwd.1} parent=1 // pred_check_branch
      %33 = sbr.rel (0) target = $region25
    $region24: #{fwd.1} parent=1 // pred_region
      %34 = dma.done [#allocation3], 256
    $region25: #{fwd.1} parent=1 // pred_fallthru
      _
    %v35 = vld [vmem:[#allocation2] sm:$0xff]
    %v36 = vld [vmem:[#allocation2 + $0x8] sm:$0xff]
    %v37 = vld [vmem:[%s4] sm:$0x1]
    %v38 = vld [vmem:[%s4 + $0x1] sm:$0x1]
    %v39 = vld [vmem:[%s4 + $0x2] sm:$0x1]
    %v40 = vld [vmem:[%s1] sm:$0xff]
    %v41 = vld [vmem:[%s1 + $0x8] sm:$0xff]
    %v42 = vld [vmem:[%s1 + $0x10] sm:$0xff]
    %v43 = vld [vmem:[%s1 + $0x18] sm:$0xff]
    %v44 = vld [vmem:[%s1 + $0x20] sm:$0xff]
    %v45 = vld [vmem:[%s1 + $0x28] sm:$0xff]
    %v46 = vld [vmem:[%s1 + $0x30] sm:$0xff]
    %v47 = vld [vmem:[%s1 + $0x38] sm:$0xff]
    %v48 = vld [vmem:[%s1 + $0x40] sm:$0xff]
    %v49 = vld [vmem:[%s1 + $0x48] sm:$0xff]
    %v50 = vld [vmem:[%s1 + $0x50] sm:$0xff]
    %v51 = vld [vmem:[%s1 + $0x58] sm:$0xff]
    %v52 = vld [vmem:[%s1 + $0x60] sm:$0xff]
    %v53 = vld [vmem:[%s1 + $0x68] sm:$0xff]
    %v54 = vld [vmem:[%s1 + $0x70] sm:$0xff]
    %v55 = vld [vmem:[%s1 + $0x78] sm:$0xff]
    %v57 = vlaneseq
    %v58 = vshrl.u32 %v57, 7
    %v59 = vsub.s32 0, %v58
    %v60 = vrot.slane %v37, %v59
    %62 = vmatprep.subr.mxu0 0.0
    %63 = vmatpush1.msra.mxu0 %v55
    %64 = vmatprep.subr.mxu0 0.0
    %65 = vmatpush1.msra.mxu0 %v54
    %66 = vmatprep.subr.mxu0 0.0
    %67 = vmatpush1.msra.mxu0 %v53
    %68 = vmatprep.subr.mxu0 0.0
    %69 = vmatpush1.msra.mxu0 %v52
    %70 = vmatprep.subr.mxu0 0.0
    %71 = vmatpush1.msra.mxu0 %v51
    %72 = vmatprep.subr.mxu0 0.0
    %73 = vmatpush1.msra.mxu0 %v50
    %74 = vmatprep.subr.mxu0 0.0
    %75 = vmatpush1.msra.mxu0 %v49
    %76 = vmatprep.subr.mxu0 0.0
    %77 = vmatpush1.msra.mxu0 %v48
    %78 = vmatprep.subr.mxu0 0.0
    %79 = vmatpush1.msra.mxu0 %v47
    %80 = vmatprep.subr.mxu0 0.0
    %81 = vmatpush1.msra.mxu0 %v46
    %82 = vmatprep.subr.mxu0 0.0
    %83 = vmatpush1.msra.mxu0 %v45
    %84 = vmatprep.subr.mxu0 0.0
    %85 = vmatpush1.msra.mxu0 %v44
    %86 = vmatprep.subr.mxu0 0.0
    %87 = vmatpush1.msra.mxu0 %v43
    %88 = vmatprep.subr.mxu0 0.0
    %89 = vmatpush1.msra.mxu0 %v42
    %90 = vmatprep.subr.mxu0 0.0
    %91 = vmatpush1.msra.mxu0 %v41
    %92 = vmatprep.subr.mxu0 0.0
    %93 = vmatpush1.msra.mxu0 %v40
    %94 = vmatprep.subr.mxu0 0.0
    %95 = vmatpush2.msra.mxu0 0.0
    %96 = vmatprep.subr.mxu0 0.0
    %97 = vmatpush2.msra.mxu0 0.0
    %98 = vmatprep.subr.mxu0 0.0
    %99 = vmatpush2.msra.mxu0 0.0
    %100 = vmatprep.subr.mxu0 0.0
    %101 = vmatpush2.msra.mxu0 0.0
    %102 = vmatprep.subr.mxu0 0.0
    %103 = vmatpush2.msra.mxu0 0.0
    %104 = vmatprep.subr.mxu0 0.0
    %105 = vmatpush2.msra.mxu0 0.0
    %106 = vmatprep.subr.mxu0 0.0
    %107 = vmatpush2.msra.mxu0 0.0
    %108 = vmatprep.subr.mxu0 0.0
    %109 = vmatpush2.msra.mxu0 0.0
    %110 = vmatprep.subr.mxu0 0.0
    %111 = vmatpush2.msra.mxu0 0.0
    %112 = vmatprep.subr.mxu0 0.0
    %113 = vmatpush2.msra.mxu0 0.0
    %114 = vmatprep.subr.mxu0 0.0
    %115 = vmatpush2.msra.mxu0 0.0
    %116 = vmatprep.subr.mxu0 0.0
    %117 = vmatpush2.msra.mxu0 0.0
    %118 = vmatprep.subr.mxu0 0.0
    %119 = vmatpush2.msra.mxu0 0.0
    %120 = vmatprep.subr.mxu0 0.0
    %121 = vmatpush2.msra.mxu0 0.0
    %122 = vmatprep.subr.mxu0 0.0
    %123 = vmatpush2.msra.mxu0 0.0
    %124 = vmatprep.subr.mxu0 0.0
    %125 = vmatpush2.msra.mxu0 0.0
    %126 = vmatprep.mubr.f32.mxu0 0.0
    %127 = vmatmul.mubr.f32.gmra.mxu0 %v35
    %v128 = vpop.f32.mrf.mxu0
    %v129 = vadd.f32 %v60, %v128
    %v130 = vpop.f32.mrf.mxu0
    %131 = vmatprep.mubr.f32.mxu0 0.0
    %132 = vmatmul.mubr.f32.gmra.mxu0 %v36
    %v133 = vpop.f32.mrf.mxu0
    %v134 = vadd.f32 %v60, %v133
    %v135 = vpop.f32.mrf.mxu0
    %136 = vdwg.mxu0
    %v137 = vmax.f32 %v129, 0.0
    %v138 = vmax.f32 %v134, 0.0
    %v139 = vld [vmem:[%s2] sm:$0xff]
    %v140 = vld [vmem:[%s2 + $0x8] sm:$0xff]
    %v141 = vld [vmem:[%s2 + $0x10] sm:$0xff]
    %v142 = vld [vmem:[%s2 + $0x18] sm:$0xff]
    %v143 = vld [vmem:[%s2 + $0x20] sm:$0xff]
    %v144 = vld [vmem:[%s2 + $0x28] sm:$0xff]
    %v145 = vld [vmem:[%s2 + $0x30] sm:$0xff]
    %v146 = vld [vmem:[%s2 + $0x38] sm:$0xff]
    %v147 = vld [vmem:[%s2 + $0x40] sm:$0xff]
    %v148 = vld [vmem:[%s2 + $0x48] sm:$0xff]
    %v149 = vld [vmem:[%s2 + $0x50] sm:$0xff]
    %v150 = vld [vmem:[%s2 + $0x58] sm:$0xff]
    %v151 = vld [vmem:[%s2 + $0x60] sm:$0xff]
    %v152 = vld [vmem:[%s2 + $0x68] sm:$0xff]
    %v153 = vld [vmem:[%s2 + $0x70] sm:$0xff]
    %v154 = vld [vmem:[%s2 + $0x78] sm:$0xff]
    %vm155 = vcmask 523264
    %v157 = vsel %vm155, %v137, 0
    %v160 = vsel %vm155, %v138, 0
    %162 = vmatprep.subr.mxu0 0.0
    %163 = vmatpush1.msra.mxu0 0.0
    %164 = vmatprep.subr.mxu0 0.0
    %165 = vmatpush1.msra.mxu0 0.0
    %166 = vmatprep.subr.mxu0 0.0
    %167 = vmatpush1.msra.mxu0 0.0
    %168 = vmatprep.subr.mxu0 0.0
    %169 = vmatpush1.msra.mxu0 0.0
    %170 = vmatprep.subr.mxu0 0.0
    %171 = vmatpush1.msra.mxu0 0.0
    %172 = vmatprep.subr.mxu0 0.0
    %173 = vmatpush1.msra.mxu0 0.0
    %174 = vmatprep.subr.mxu0 0.0
    %175 = vmatpush1.msra.mxu0 0.0
    %176 = vmatprep.subr.mxu0 0.0
    %177 = vmatpush1.msra.mxu0 0.0
    %178 = vmatprep.subr.mxu0 %v154
    %179 = vmatpush1.msra.mxu0 %v153
    %180 = vmatprep.subr.mxu0 %v152
    %181 = vmatpush1.msra.mxu0 %v151
    %182 = vmatprep.subr.mxu0 %v150
    %183 = vmatpush1.msra.mxu0 %v149
    %184 = vmatprep.subr.mxu0 %v148
    %185 = vmatpush1.msra.mxu0 %v147
    %186 = vmatprep.subr.mxu0 %v146
    %187 = vmatpush1.msra.mxu0 %v145
    %188 = vmatprep.subr.mxu0 %v144
    %189 = vmatpush1.msra.mxu0 %v143
    %190 = vmatprep.subr.mxu0 %v142
    %191 = vmatpush1.msra.mxu0 %v141
    %192 = vmatprep.subr.mxu0 %v140
    %193 = vmatpush1.msra.mxu0 %v139
    %194 = vmatprep.subr.mxu0 0.0
    %195 = vmatpush2.msra.mxu0 0.0
    %196 = vmatprep.subr.mxu0 0.0
    %197 = vmatpush2.msra.mxu0 0.0
    %198 = vmatprep.subr.mxu0 0.0
    %199 = vmatpush2.msra.mxu0 0.0
    %200 = vmatprep.subr.mxu0 0.0
    %201 = vmatpush2.msra.mxu0 0.0
    %202 = vmatprep.subr.mxu0 0.0
    %203 = vmatpush2.msra.mxu0 0.0
    %204 = vmatprep.subr.mxu0 0.0
    %205 = vmatpush2.msra.mxu0 0.0
    %206 = vmatprep.subr.mxu0 0.0
    %207 = vmatpush2.msra.mxu0 0.0
    %208 = vmatprep.subr.mxu0 0.0
    %209 = vmatpush2.msra.mxu0 0.0
    %210 = vmatprep.subr.mxu0 0.0
    %211 = vmatpush2.msra.mxu0 0.0
    %212 = vmatprep.subr.mxu0 0.0
    %213 = vmatpush2.msra.mxu0 0.0
    %214 = vmatprep.subr.mxu0 0.0
    %215 = vmatpush2.msra.mxu0 0.0
    %216 = vmatprep.subr.mxu0 0.0
    %217 = vmatpush2.msra.mxu0 0.0
    %218 = vmatprep.subr.mxu0 0.0
    %219 = vmatpush2.msra.mxu0 0.0
    %220 = vmatprep.subr.mxu0 0.0
    %221 = vmatpush2.msra.mxu0 0.0
    %222 = vmatprep.subr.mxu0 0.0
    %223 = vmatpush2.msra.mxu0 0.0
    %224 = vmatprep.subr.mxu0 0.0
    %225 = vmatpush2.msra.mxu0 0.0
    %226 = vmatprep.mubr.f32.mxu0 0.0
    %227 = vmatmul.mubr.f32.gmra.mxu0 %v157
    %v228 = vpop.f32.mrf.mxu0
    %v229 = vadd.f32 0.0, %v228
    %v230 = vpop.f32.mrf.mxu0
    %v231 = vadd.f32 0.0, %v230
    %232 = vmatprep.mubr.f32.mxu0 0.0
    %233 = vmatmul.mubr.f32.gmra.mxu0 %v160
    %v234 = vpop.f32.mrf.mxu0
    %v235 = vadd.f32 0.0, %v234
    %v236 = vpop.f32.mrf.mxu0
    %v237 = vadd.f32 0.0, %v236
    %238 = vdwg.mxu0
    %v239 = vlaneseq
    %v240 = vshrl.u32 %v239, 7
    %v241 = vadd.s32 %v240, 8
    %vm242 = vcmp.lt.s32.totalorder %v240, 0
    %v243 = vsub.s32 0, %v240
    %v244 = vsel %vm242, %v243, %v240
    %v245 = vshrl.u32 %v244, 3
    %v246 = vand.u32 %v244, 7
    %v247 = vsub.s32 0, %v246
    %v248 = vsel %vm242, %v247, %v246
    %vm249 = vcmp.lt.s32.totalorder %v241, 0
    %v250 = vsub.s32 0, %v241
    %v251 = vsel %vm249, %v250, %v241
    %v252 = vshrl.u32 %v251, 3
    %v253 = vand.u32 %v251, 7
    %v254 = vsub.s32 0, %v253
    %v255 = vsel %vm249, %v254, %v253
    %vm256 = vcmp.ne.s32.totalorder %v248, 0
    %vm257 = vcmp.ne.s32.totalorder %v255, 0
    %vm258 = vcmp.lt.s32.totalorder %v248, 0
    %vm259 = vcmp.lt.s32.totalorder %v255, 0
    %vm260 = vmand %vm258, %vm256
    %vm261 = vmand %vm259, %vm257
    %v262 = vadd.s32 %v248, 8
    %v263 = vadd.s32 %v255, 8
    %v264 = vsel %vm260, %v262, %v248
    %v265 = vsel %vm261, %v263, %v255
    %vm266 = vcmp.ne.s32.totalorder %v264, 0
    %vm267 = vcmp.ne.s32.totalorder %v265, 0
    %v268 = vrot.slane %v229, 7
    %v269 = vrot.slane %v235, 7
    %vm270 = vcmp.lt.s32.totalorder %v240, 1
    %v271 = vsel %vm270, %v268, %v269
    %v272 = vsel %vm270, %v269, %v268
    %v273 = vsel %vm266, %v272, 0.0
    %v274 = vsel %vm267, %v271, 0.0
    %vm275 = vcmp.ne.s32.totalorder %v264, 7
    %vm276 = vcmp.ne.s32.totalorder %v265, 7
    %v277 = vrot.slane %v231, 1
    %v278 = vrot.slane %v237, 1
    %vm279 = vcmp.lt.s32.totalorder %v240, 7
    %v280 = vsel %vm279, %v277, %v278
    %v281 = vsel %vm279, %v278, %v277
    %v282 = vsel %vm275, %v280, 0.0
    %v283 = vsel %vm276, %v281, 0.0
    %286 = vrot.lane.b32.xlu0 %v229, 64
    %v287 = vpop.permute.xlu0 %286
    %288 = vrot.lane.b32.xlu0 %v235, 64
    %v289 = vpop.permute.xlu0 %288
    %v292 = vadd.f32 %v273, %v287
    %v293 = vadd.f32 %v274, %v289
    %v294 = vadd.f32 %v292, %v282
    %v295 = vadd.f32 %v293, %v283
    %v297 = vlaneseq
    %v298 = vshrl.u32 %v297, 7
    %v299 = vsub.s32 0, %v298
    %v300 = vrot.slane %v38, %v299
    %v302 = vadd.f32 %v294, %v300
    %v303 = vadd.f32 %v295, %v300
    %v304 = vmax.f32 %v302, 0.0
    %v305 = vmax.f32 %v303, 0.0
    %v306 = vld [vmem:[%s3] sm:$0xff]
    %v307 = vld [vmem:[%s3 + $0x8] sm:$0xff]
    %v308 = vld [vmem:[%s3 + $0x10] sm:$0xff]
    %v309 = vld [vmem:[%s3 + $0x18] sm:$0xff]
    %v310 = vld [vmem:[%s3 + $0x20] sm:$0xff]
    %v311 = vld [vmem:[%s3 + $0x28] sm:$0xff]
    %v312 = vld [vmem:[%s3 + $0x30] sm:$0xff]
    %v313 = vld [vmem:[%s3 + $0x38] sm:$0xff]
    %v315 = vlaneseq
    %v316 = vshrl.u32 %v315, 7
    %v317 = vsub.s32 0, %v316
    %v318 = vrot.slane %v39, %v317
    %v321 = vsel %vm155, %v304, 0
    %v324 = vsel %vm155, %v305, 0
    %326 = vmatprep.subr.mxu0 0.0
    %327 = vmatpush1.msra.mxu0 0.0
    %328 = vmatprep.subr.mxu0 0.0
    %329 = vmatpush1.msra.mxu0 0.0
    %330 = vmatprep.subr.mxu0 0.0
    %331 = vmatpush1.msra.mxu0 0.0
    %332 = vmatprep.subr.mxu0 0.0
    %333 = vmatpush1.msra.mxu0 0.0
    %334 = vmatprep.subr.mxu0 0.0
    %335 = vmatpush1.msra.mxu0 0.0
    %336 = vmatprep.subr.mxu0 0.0
    %337 = vmatpush1.msra.mxu0 0.0
    %338 = vmatprep.subr.mxu0 0.0
    %339 = vmatpush1.msra.mxu0 0.0
    %340 = vmatprep.subr.mxu0 0.0
    %341 = vmatpush1.msra.mxu0 0.0
    %342 = vmatprep.subr.mxu0 0.0
    %343 = vmatpush1.msra.mxu0 %v313
    %344 = vmatprep.subr.mxu0 0.0
    %345 = vmatpush1.msra.mxu0 %v312
    %346 = vmatprep.subr.mxu0 0.0
    %347 = vmatpush1.msra.mxu0 %v311
    %348 = vmatprep.subr.mxu0 0.0
    %349 = vmatpush1.msra.mxu0 %v310
    %350 = vmatprep.subr.mxu0 0.0
    %351 = vmatpush1.msra.mxu0 %v309
    %352 = vmatprep.subr.mxu0 0.0
    %353 = vmatpush1.msra.mxu0 %v308
    %354 = vmatprep.subr.mxu0 0.0
    %355 = vmatpush1.msra.mxu0 %v307
    %356 = vmatprep.subr.mxu0 0.0
    %357 = vmatpush1.msra.mxu0 %v306
    %358 = vmatprep.subr.mxu0 0.0
    %359 = vmatpush2.msra.mxu0 0.0
    %360 = vmatprep.subr.mxu0 0.0
    %361 = vmatpush2.msra.mxu0 0.0
    %362 = vmatprep.subr.mxu0 0.0
    %363 = vmatpush2.msra.mxu0 0.0
    %364 = vmatprep.subr.mxu0 0.0
    %365 = vmatpush2.msra.mxu0 0.0
    %366 = vmatprep.subr.mxu0 0.0
    %367 = vmatpush2.msra.mxu0 0.0
    %368 = vmatprep.subr.mxu0 0.0
    %369 = vmatpush2.msra.mxu0 0.0
    %370 = vmatprep.subr.mxu0 0.0
    %371 = vmatpush2.msra.mxu0 0.0
    %372 = vmatprep.subr.mxu0 0.0
    %373 = vmatpush2.msra.mxu0 0.0
    %374 = vmatprep.subr.mxu0 0.0
    %375 = vmatpush2.msra.mxu0 0.0
    %376 = vmatprep.subr.mxu0 0.0
    %377 = vmatpush2.msra.mxu0 0.0
    %378 = vmatprep.subr.mxu0 0.0
    %379 = vmatpush2.msra.mxu0 0.0
    %380 = vmatprep.subr.mxu0 0.0
    %381 = vmatpush2.msra.mxu0 0.0
    %382 = vmatprep.subr.mxu0 0.0
    %383 = vmatpush2.msra.mxu0 0.0
    %384 = vmatprep.subr.mxu0 0.0
    %385 = vmatpush2.msra.mxu0 0.0
    %386 = vmatprep.subr.mxu0 0.0
    %387 = vmatpush2.msra.mxu0 0.0
    %388 = vmatprep.subr.mxu0 0.0
    %389 = vmatpush2.msra.mxu0 0.0
    %390 = vmatprep.mubr.f32.mxu0 0.0
    %391 = vmatmul.mubr.f32.gmra.mxu0 %v321
    %v392 = vpop.f32.mrf.mxu0
    %v393 = vadd.f32 %v318, %v392
    %v394 = vpop.f32.mrf.mxu0
    %395 = vmatprep.mubr.f32.mxu0 0.0
    %396 = vmatmul.mubr.f32.gmra.mxu0 %v324
    %v397 = vpop.f32.mrf.mxu0
    %v398 = vadd.f32 %v318, %v397
    %v399 = vpop.f32.mrf.mxu0
    %400 = vdwg.mxu0
    %v401 = vadd.f32 %v393, %v35
    %v402 = vadd.f32 %v398, %v36
    %v403 = vmax.f32 %v401, 0.0
    %v404 = vmax.f32 %v402, 0.0
    %405 = vst [vmem:[#allocation5] sm:$0xff] %v403
    %406 = vst [vmem:[#allocation5 + $0x8] sm:$0xff] %v404
    // Predicated region
    $region26: #{fwd.1} parent=1 // pred_check
      _
    $region27: #{fwd.1} parent=1 // pred_check_branch
      %408 = sbr.rel (0) target = $region29
    $region28: #{fwd.1} parent=1 // pred_region
      %s410 = ssub.s32 256, 256
      %411 = vsyncadd [#allocation4], %s410
      %s412 = sshll.u32 [#allocation5], 4
      %s413 = int_to_ptr.vmem [resolvable:$true] %s412
      %418 = dma.vmem_to_hbm [thread:$0]  %s413, 256, %s5, [#allocation4], 128, 128, 8
    $region29: #{fwd.1} parent=1 // pred_fallthru
      _
    // Predicated region
    $region30: #{fwd.1} parent=1 // pred_check
      _
    $region31: #{fwd.1} parent=1 // pred_check_branch
      %420 = sbr.rel (0) target = $region33
    $region32: #{fwd.1} parent=1 // pred_region
      %421 = dma.done [#allocation4], 256
    $region33: #{fwd.1} parent=1 // pred_fallthru
      _
    %422 = vsyncpa [#allocation3], 1
    %423 = vsyncpa [#allocation4], 1

</llo_original>
